<compile_context>
chip_gen: v7x
topology: tpu7x:2x2x1
jax: 0.10.0
libtpu: 0.0.40
codegen_flags: <defaults>
</compile_context>

<pallas_src>
import jax
import jax.numpy as jnp
from jax.experimental import pallas as pl
from jax.experimental.pallas import tpu as pltpu

# ---------------- model config (from BaseCNNNetworkMask.__init__) -----------
NUM_FEAT = 6                    # num_feat
FORECASTERS = 6                 # forecasters_num
K = 4                           # conv kernel size (both layers)
C1_IN, C1_OUT, C1_PAD, C1_DIL = 6, 16, 1, 1
C2_IN, C2_OUT, C2_PAD, C2_DIL = 16, 32, 2, 2
SEQ_LEN = 11                    # conv1 -> L=10, conv2 -> L=8; 32*8 + 12 = 268 = Linear in
L1 = SEQ_LEN + 2 * C1_PAD - C1_DIL * (K - 1)    # 10
L2 = L1 + 2 * C2_PAD - C2_DIL * (K - 1)         # 8
FLAT = C2_OUT * L2                              # 256
FC_IN = FLAT + 2 * FORECASTERS                  # 268 (Linear(268, 128))
X_FLAT = SEQ_LEN * NUM_FEAT                     # 66  (flattened raw input)
HID = 128
BN_EPS = 1e-5
BIG = 1e30                                      # finite "-inf" for the masked softmax


def _round_up(n, m):
    return ((n + m - 1) // m) * m


# ---------------- pure-JAX affine chain (folding + reference) ---------------
def _logits_affine(x, preds_all, p):
    """Pre-softmax logits of BaseCNNNetworkMask. x: (N,11,6) NLC, preds_all: (N,12)."""
    n = x.shape[0]
    xp = jnp.pad(x, ((0, 0), (C1_PAD, C1_PAD), (0, 0)))
    h1 = jnp.zeros((n, L1, C1_OUT), jnp.float32)
    for k in range(K):
        h1 = h1 + jnp.einsum("ntc,co->nto",
                             xp[:, k * C1_DIL:k * C1_DIL + L1, :],
                             p["w1"][k * C1_IN:(k + 1) * C1_IN, :])
    h1 = h1 + p["b1"][None, :, :]
    hp = jnp.pad(h1, ((0, 0), (C2_PAD, C2_PAD), (0, 0)))
    h2 = jnp.zeros((n, L2, C2_OUT), jnp.float32)
    for k in range(K):
        h2 = h2 + jnp.einsum("ntc,co->nto",
                             hp[:, k * C2_DIL:k * C2_DIL + L2, :],
                             p["w2"][k * C2_IN:(k + 1) * C2_IN, :])
    h2 = h2 + p["b2"][None, :, :]
    feat = jnp.concatenate([h2.reshape(n, FLAT), preds_all], axis=1)       # (N, 268)
    h = feat @ p["fc1_w"] + p["fc1_b"]
    h = (h - p["bn_mean"]) * jax.lax.rsqrt(p["bn_var"] + BN_EPS) * p["bn_gamma"] + p["bn_beta"]
    return h @ p["fc2_w"] + p["fc2_b"]                                     # (N, 6)


def fold_params(p):
    """Fold the whole affine chain (exact, it is linear) into
       logits = x.reshape(B, 66) @ w_x + preds_to_ensemble @ w_p + b."""
    feat_dim = X_FLAT + 2 * FORECASTERS                                    # 78
    eye = jnp.eye(feat_dim, dtype=jnp.float32)
    x_basis = eye[:, :X_FLAT].reshape(feat_dim, SEQ_LEN, NUM_FEAT)
    pr_basis = eye[:, X_FLAT:]
    b = _logits_affine(jnp.zeros((1, SEQ_LEN, NUM_FEAT), jnp.float32),
                       jnp.zeros((1, 2 * FORECASTERS), jnp.float32), p)    # (1, 6)
    w_eff = _logits_affine(x_basis, pr_basis, p) - b                       # (78, 6)
    return w_eff[:X_FLAT], w_eff[X_FLAT:], b                               # (66,6),(12,6),(1,6)


def reference_forward(x, preds_all, p):
    logits = _logits_affine(x.astype(jnp.float32), preds_all.astype(jnp.float32), p)
    preds = preds_all[:, :FORECASTERS]
    msk = preds_all[:, FORECASTERS:]
    ml = jnp.where(msk > 0, logits, -BIG)
    w = jax.nn.softmax(ml, axis=1)
    return jnp.sum(preds * w, axis=1)


# ---------------------------- Pallas kernel ---------------------------------
def _ensemble_kernel(x_ref, p_ref, wx_ref, wp_ref, wpen_ref, b_ref, out_ref):
    x = x_ref[...]                                        # (tb, 66)  caller dtype (f32/bf16)
    p = p_ref[...]                                        # (tb, 12)  f32: [preds | mask]

    # Folded network: natural-form MXU matmuls, f32 accumulation.
    logits = (jnp.dot(x, wx_ref[...], preferred_element_type=jnp.float32)
              + jnp.dot(p, wp_ref[...], preferred_element_type=jnp.float32)
              + b_ref[...])                               # (tb, 6) f32

    # Masking without lane-slicing the mask at offset 6 (which would cost a lane
    # rotation per vreg) and without a where(): (p @ w_pen) == BIG * mask exactly
    # (mask is {0,1}), so `pen` is exactly {-BIG, 0} and
    # ml == where(mask > 0, logits, logits - BIG)  ==  masked_softmax input.
    pen = jnp.dot(p, wpen_ref[...], preferred_element_type=jnp.float32) - BIG
    ml = logits + pen

    # Softmax over the 6 forecasters (f32 math; the max is the only cross-lane reduce).
    m = jnp.max(ml, axis=1, keepdims=True)                # (tb, 1)
    e = jnp.exp(ml - m)                                   # masked -> 0; all-masked -> uniform

    # Weighted forecast sum & softmax denominator as (tb,6)@(6,1) MXU matmuls in the
    # natural orientation -> no relayout of the big tile, MXU is otherwise idle.
    preds = p[:, :FORECASTERS].astype(jnp.float32)        # lanes 0..5: no lane rotation
    ones = jnp.ones((FORECASTERS, 1), jnp.float32)
    num = jnp.dot(e * preds, ones, preferred_element_type=jnp.float32)     # (tb, 1)
    den = jnp.dot(e, ones, preferred_element_type=jnp.float32)             # (tb, 1)

    # Divide on the (otherwise idle) EUP: approx reciprocal + one Newton step.
    inv = pl.reciprocal(den, approx=True)
    inv = inv * (2.0 - den * inv)
    out_ref[...] = (num * inv).astype(out_ref.dtype)


def _pick_tile_and_vmem(batch, block_rows):
    """Generation-aware batch tile.
    Per-row VMEM (f32, each block lane-padded to 128 lanes): x tile 512 B + preds tile
    512 B + out tile 512 B, each double-buffered -> 3072 B/row.
    v5e/v6e (128 MiB VMEM) -> tb ~26K rows; v7x (64 MiB) -> tb ~13K rows."""
    try:
        vmem_cap = int(pltpu.get_tpu_info().vmem_capacity_bytes)
    except Exception:
        vmem_cap = 64 * 1024 * 1024                       # conservative fallback (v7x-sized)
    per_row = 2 * 3 * 512
    tb = (int(vmem_cap * 0.6) // per_row) // 128 * 128    # double-buffered tiles fit VMEM
    tb = min(tb, max(128, (int(block_rows) // 128) * 128))
    # Keep >=4 grid blocks when the batch allows it so v7x's two TensorCores (and the
    # software pipeline) always have work; harmless on v5e/v6e.
    tb = min(tb, max(128, _round_up(pl.cdiv(batch, 4), 128)))
    if batch < 128:
        tb = batch                                        # full-extent block (equals array dim)
    vmem_limit = int(min(vmem_cap * 0.85, 127 * 1024 * 1024))
    return tb, vmem_limit


def base_cnn_network_mask_forward(x, preds_to_ensemble, w_x, w_p, b, *, block_rows=32768):
    """x: (B, 11, 6); preds_to_ensemble: (B, 12) = [6 forecasts | 6 binary mask].
    w_x / w_p / b come from fold_params (computed once per checkpoint, outside this call).
    x may be f32 or bf16 (bf16 halves the dominant HBM stream); preds stay f32."""
    batch = x.shape[0]
    x_flat = x.reshape(batch, X_FLAT)                      # free, contiguous reshape
    p_all = preds_to_ensemble.astype(jnp.float32)          # keep preds/mask f32 (no-op if f32)
    w_x = w_x.astype(x_flat.dtype)                         # bf16 x -> bf16 weights on the MXU
    w_p = w_p.astype(jnp.float32)
    b = b.astype(jnp.float32)
    # Mask "projection": (p @ w_pen)[t, f] = BIG * mask[t, f]  (exact for {0,1} masks).
    w_pen = jnp.zeros((2 * FORECASTERS, FORECASTERS), jnp.float32)
    w_pen = w_pen.at[jnp.arange(FORECASTERS) + FORECASTERS, jnp.arange(FORECASTERS)].set(BIG)

    tb, vmem_limit = _pick_tile_and_vmem(batch, block_rows)
    grid = (pl.cdiv(batch, tb),)                           # ragged last block: OOB reads are
                                                           # garbage (per-row math -> harmless),
                                                           # OOB output writes are dropped.
    cost = pl.CostEstimate(
        flops=2 * batch * FORECASTERS * (X_FLAT + 4 * FORECASTERS + 2),
        transcendentals=batch * (FORECASTERS + 1),
        bytes_accessed=(x_flat.size * x_flat.dtype.itemsize + p_all.size * 4 + batch * 4
                        + (w_x.size + w_p.size + w_pen.size + b.size) * 4))

    out = pl.pallas_call(
        _ensemble_kernel,
        out_shape=jax.ShapeDtypeStruct((batch, 1), jnp.float32),
        grid=grid,
        in_specs=[
            # streamed batch tiles (double-buffered by the Pallas pipeline)
            pl.BlockSpec((tb, X_FLAT), lambda i: (i, 0)),
            pl.BlockSpec((tb, 2 * FORECASTERS), lambda i: (i, 0)),
            # small weights: constant index_map -> fetched once, stay VMEM-resident
            pl.BlockSpec((X_FLAT, FORECASTERS), lambda i: (0, 0)),
            pl.BlockSpec((2 * FORECASTERS, FORECASTERS), lambda i: (0, 0)),
            pl.BlockSpec((2 * FORECASTERS, FORECASTERS), lambda i: (0, 0)),
            pl.BlockSpec((1, FORECASTERS), lambda i: (0, 0)),
        ],
        out_specs=pl.BlockSpec((tb, 1), lambda i: (i, 0)),
        compiler_params=pltpu.CompilerParams(
            dimension_semantics=("parallel",),             # batch axis -> both v7x TCs
            vmem_limit_bytes=vmem_limit),
        cost_estimate=cost,
    )(x_flat, p_all, w_x, w_p, w_pen, b)
    return out[:, 0]                                       # (B,)


# ------------------------------- parameters ---------------------------------
def make_params(key):
    ks = jax.random.split(key, 10)
    f32 = jnp.float32
    return {
        # conv weights stored as (K*C_in, C_out); row k*C_in + c == torch W[:, c, k].T
        "w1": 0.2 * jax.random.normal(ks[0], (K * C1_IN, C1_OUT), f32),
        "b1": 0.1 * jax.random.normal(ks[1], (1, C1_OUT), f32),
        "w2": 0.1 * jax.random.normal(ks[2], (K * C2_IN, C2_OUT), f32),
        "b2": 0.1 * jax.random.normal(ks[3], (1, C2_OUT), f32),
        "fc1_w": 0.05 * jax.random.normal(ks[4], (FC_IN, HID), f32),
        "fc1_b": 0.05 * jax.random.normal(ks[5], (1, HID), f32),
        "bn_gamma": 1.0 + 0.1 * jax.random.normal(ks[6], (1, HID), f32),
        "bn_beta": 0.1 * jax.random.normal(ks[7], (1, HID), f32),
        "bn_mean": jnp.zeros((1, HID), f32),               # PyTorch BN default running stats
        "bn_var": jnp.ones((1, HID), f32),
        "fc2_w": 0.1 * jax.random.normal(ks[8], (HID, FORECASTERS), f32),
        "fc2_b": 0.1 * jax.random.normal(ks[9], (1, FORECASTERS), f32),
    }


if __name__ == "__main__":
    key = jax.random.PRNGKey(0)
    k_param, k_x, k_pred, k_mask = jax.random.split(key, 4)
    params = make_params(k_param)
    # Folding runs ONCE per checkpoint, outside the jitted per-call path.
    w_x, w_p, b_eff = fold_params(params)

    B = 300   # tb=128 -> 3-block grid with a ragged (44-row) last block
    x = jax.random.normal(k_x, (B, SEQ_LEN, NUM_FEAT), jnp.float32)
    pred_vals = jax.random.normal(k_pred, (B, FORECASTERS), jnp.float32)
    mask = (jax.random.uniform(k_mask, (B, FORECASTERS)) > 0.3).astype(jnp.float32)
    mask = mask.at[:, 0].set(1.0)   # guarantee >=1 available forecaster per row
    preds_all = jnp.concatenate([pred_vals, mask], axis=1)          # (B, 12)

    ref = reference_forward(x, preds_all, params)

    fwd = jax.jit(base_cnn_network_mask_forward, static_argnames=("block_rows",))

    # f32 path: tiny batch (single full-extent block) and a multi-tile ragged grid.
    for bsz in (2, B):
        out = fwd(x[:bsz], preds_all[:bsz], w_x, w_p, b_eff)
        jax.block_until_ready(out)
        assert out.shape == (bsz,)
        assert bool(jnp.allclose(out, ref[:bsz], rtol=1e-3, atol=1e-3)), (bsz, out, ref[:bsz])

    # bf16-from-upstream x (preds/mask stay f32): halves the dominant HBM stream.
    out_bf16 = fwd(x.astype(jnp.bfloat16), preds_all, w_x, w_p, b_eff)
    jax.block_until_ready(out_bf16)
    assert bool(jnp.allclose(out_bf16, ref, rtol=5e-2, atol=5e-2))

    print("KERNEL_OK")
</pallas_src>

<mosaic_0001>
module attributes {stable_mosaic.version = 11 : i64} {
  func.func @_ensemble_kernel(%arg0: i32, %arg1: memref<2x66xf32, #tpu.memory_space<vmem>>, %arg2: memref<2x12xf32, #tpu.memory_space<vmem>>, %arg3: memref<66x6xf32, #tpu.memory_space<vmem>>, %arg4: memref<12x6xf32, #tpu.memory_space<vmem>>, %arg5: memref<12x6xf32, #tpu.memory_space<vmem>>, %arg6: memref<1x6xf32, #tpu.memory_space<vmem>>, %arg7: memref<2x1xf32, #tpu.memory_space<vmem>>) attributes {dimension_semantics = [#tpu.dimension_semantics<parallel>], iteration_bounds = array<i64: 1>, scalar_prefetch = 0 : i64, scratch_operands = 0 : i64, tpu.core_type = #tpu.core_type<tc>, window_params = [{transform_indices = @transform_0, window_bounds = array<i64: 2, 66>}, {transform_indices = @transform_1, window_bounds = array<i64: 2, 12>}, {pipeline_mode = #tpu.pipeline_mode<synchronous>, transform_indices = @transform_2, window_bounds = array<i64: 66, 6>}, {pipeline_mode = #tpu.pipeline_mode<synchronous>, transform_indices = @transform_3, window_bounds = array<i64: 12, 6>}, {pipeline_mode = #tpu.pipeline_mode<synchronous>, transform_indices = @transform_4, window_bounds = array<i64: 12, 6>}, {pipeline_mode = #tpu.pipeline_mode<synchronous>, transform_indices = @transform_5, window_bounds = array<i64: 1, 6>}, {transform_indices = @transform_6, window_bounds = array<i64: 2, 1>}]} {
    %c0 = arith.constant 0 : index
    %c0_0 = arith.constant 0 : index
    %0 = vector.load %arg1[%c0, %c0_0] : memref<2x66xf32, #tpu.memory_space<vmem>>, vector<2x66xf32>
    %c0_1 = arith.constant 0 : index
    %c0_2 = arith.constant 0 : index
    %1 = vector.load %arg2[%c0_1, %c0_2] : memref<2x12xf32, #tpu.memory_space<vmem>>, vector<2x12xf32>
    %c0_3 = arith.constant 0 : index
    %c0_4 = arith.constant 0 : index
    %2 = vector.load %arg3[%c0_3, %c0_4] : memref<66x6xf32, #tpu.memory_space<vmem>>, vector<66x6xf32>
    %cst = arith.constant dense<0.000000e+00> : vector<2x6xf32>
    %3 = tpu.matmul %0, %2, %cst {dimension_numbers = #tpu.dot_dimension_numbers<[1], [0], [0], [1], [0, 0, 1, 1], [], []>} : vector<2x66xf32>, vector<66x6xf32>, vector<2x6xf32> -> vector<2x6xf32>
    %c0_5 = arith.constant 0 : index
    %c0_6 = arith.constant 0 : index
    %4 = vector.load %arg4[%c0_5, %c0_6] : memref<12x6xf32, #tpu.memory_space<vmem>>, vector<12x6xf32>
    %cst_7 = arith.constant dense<0.000000e+00> : vector<2x6xf32>
    %5 = tpu.matmul %1, %4, %cst_7 {dimension_numbers = #tpu.dot_dimension_numbers<[1], [0], [0], [1], [0, 0, 1, 1], [], []>} : vector<2x12xf32>, vector<12x6xf32>, vector<2x6xf32> -> vector<2x6xf32>
    %6 = arith.addf %3, %5 : vector<2x6xf32>
    %c0_8 = arith.constant 0 : index
    %c0_9 = arith.constant 0 : index
    %7 = vector.load %arg6[%c0_8, %c0_9] : memref<1x6xf32, #tpu.memory_space<vmem>>, vector<1x6xf32>
    %8 = vector.broadcast %7 : vector<1x6xf32> to vector<2x6xf32>
    %9 = arith.addf %6, %8 : vector<2x6xf32>
    %c0_10 = arith.constant 0 : index
    %c0_11 = arith.constant 0 : index
    %10 = vector.load %arg5[%c0_10, %c0_11] : memref<12x6xf32, #tpu.memory_space<vmem>>, vector<12x6xf32>
    %cst_12 = arith.constant dense<0.000000e+00> : vector<2x6xf32>
    %11 = tpu.matmul %1, %10, %cst_12 {dimension_numbers = #tpu.dot_dimension_numbers<[1], [0], [0], [1], [0, 0, 1, 1], [], []>} : vector<2x12xf32>, vector<12x6xf32>, vector<2x6xf32> -> vector<2x6xf32>
    %cst_13 = arith.constant 1.000000e+30 : f32
    %12 = vector.broadcast %cst_13 : f32 to vector<2x6xf32>
    %13 = arith.subf %11, %12 : vector<2x6xf32>
    %14 = arith.addf %9, %13 : vector<2x6xf32>
    %cst_14 = arith.constant dense<0xFF800000> : vector<2xf32>
    %15 = vector.multi_reduction <maximumf>, %14, %cst_14 [1] : vector<2x6xf32> to vector<2xf32>
    %16 = vector.shape_cast %15 : vector<2xf32> to vector<2x1xf32>
    %17 = vector.broadcast %16 : vector<2x1xf32> to vector<2x6xf32>
    %18 = arith.subf %14, %17 : vector<2x6xf32>
    %19 = math.exp %18 : vector<2x6xf32>
    %20 = vector.extract_strided_slice %1 {offsets = [0, 0], sizes = [2, 6], strides = [1, 1]} : vector<2x12xf32> to vector<2x6xf32>
    %cst_15 = arith.constant 1.000000e+00 : f32
    %21 = vector.broadcast %cst_15 : f32 to vector<6x1xf32>
    %22 = arith.mulf %19, %20 : vector<2x6xf32>
    %cst_16 = arith.constant dense<0.000000e+00> : vector<2x1xf32>
    %23 = tpu.matmul %22, %21, %cst_16 {dimension_numbers = #tpu.dot_dimension_numbers<[1], [0], [0], [1], [0, 0, 1, 1], [], []>} : vector<2x6xf32>, vector<6x1xf32>, vector<2x1xf32> -> vector<2x1xf32>
    %cst_17 = arith.constant dense<0.000000e+00> : vector<2x1xf32>
    %24 = tpu.matmul %19, %21, %cst_17 {dimension_numbers = #tpu.dot_dimension_numbers<[1], [0], [0], [1], [0, 0, 1, 1], [], []>} : vector<2x6xf32>, vector<6x1xf32>, vector<2x1xf32> -> vector<2x1xf32>
    %25 = tpu.reciprocal %24 {approx = true} : vector<2x1xf32> -> vector<2x1xf32>
    %26 = arith.mulf %24, %25 : vector<2x1xf32>
    %cst_18 = arith.constant 2.000000e+00 : f32
    %27 = vector.broadcast %cst_18 : f32 to vector<2x1xf32>
    %28 = arith.subf %27, %26 : vector<2x1xf32>
    %29 = arith.mulf %25, %28 : vector<2x1xf32>
    %30 = arith.mulf %23, %29 : vector<2x1xf32>
    %c0_19 = arith.constant 0 : index
    %c0_20 = arith.constant 0 : index
    %31 = vector.load %arg7[%c0_19, %c0_20] : memref<2x1xf32, #tpu.memory_space<vmem>>, vector<2x1xf32>
    tpu.vector_store %arg7[%c0_19, %c0_20], %30 {strides = array<i32>} : memref<2x1xf32, #tpu.memory_space<vmem>>, vector<2x1xf32>,
    return
  }
  func.func @transform_0(%arg0: i32) -> (i32, i32) {
    %c0_i32 = arith.constant 0 : i32
    %c0_i32_0 = arith.constant 0 : i32
    return %arg0, %c0_i32 : i32, i32
  }
  func.func @transform_1(%arg0: i32) -> (i32, i32) {
    %c0_i32 = arith.constant 0 : i32
    %c0_i32_0 = arith.constant 0 : i32
    return %arg0, %c0_i32 : i32, i32
  }
  func.func @transform_2(%arg0: i32) -> (i32, i32) {
    %c0_i32 = arith.constant 0 : i32
    %c0_i32_0 = arith.constant 0 : i32
    %c0_i32_1 = arith.constant 0 : i32
    return %c0_i32, %c0_i32_0 : i32, i32
  }
  func.func @transform_3(%arg0: i32) -> (i32, i32) {
    %c0_i32 = arith.constant 0 : i32
    %c0_i32_0 = arith.constant 0 : i32
    %c0_i32_1 = arith.constant 0 : i32
    return %c0_i32, %c0_i32_0 : i32, i32
  }
  func.func @transform_4(%arg0: i32) -> (i32, i32) {
    %c0_i32 = arith.constant 0 : i32
    %c0_i32_0 = arith.constant 0 : i32
    %c0_i32_1 = arith.constant 0 : i32
    return %c0_i32, %c0_i32_0 : i32, i32
  }
  func.func @transform_5(%arg0: i32) -> (i32, i32) {
    %c0_i32 = arith.constant 0 : i32
    %c0_i32_0 = arith.constant 0 : i32
    %c0_i32_1 = arith.constant 0 : i32
    return %c0_i32, %c0_i32_0 : i32, i32
  }
  func.func @transform_6(%arg0: i32) -> (i32, i32) {
    %c0_i32 = arith.constant 0 : i32
    %c0_i32_0 = arith.constant 0 : i32
    return %arg0, %c0_i32 : i32, i32
  }
}

</mosaic_0001>

<llo_original>
// kernel: base_cnn_network_mask_forward.1
$region0: #{base_cnn_network_mask_forward.1}
  #allocation0 [shape = 'u32[]', space=smem, size = 0x4, offset = 0x4, fixed_abs, tag = 'smem constant byte address 0x4 - core index']
  #allocation1 [shape = 'u32[144,128]{1,0:T(1,128)}', space=vmem, size = 0x12000, scoped, tag = 'internal scratch']
  %s0 = inlined_call_operand.vmem [shape: f32[2,66], index: 0, kind: input, shape index: {}]
  %s1 = inlined_call_operand.vmem [shape: f32[2,12], index: 1, kind: input, shape index: {}]
  %s2 = inlined_call_operand.vmem [shape: f32[66,6], index: 2, kind: input, shape index: {}]
  %s3 = inlined_call_operand.vmem [shape: f32[12,6], index: 3, kind: input, shape index: {}]
  %s4 = inlined_call_operand.vmem [shape: f32[12,6], index: 4, kind: input, shape index: {}]
  %s5 = inlined_call_operand.vmem [shape: f32[1,6], index: 5, kind: input, shape index: {}]
  %s6 = inlined_call_operand.vmem [shape: f32[2,1], index: 6, kind: output, shape index: {}]
  %s7 = sld [smem:[#allocation0]]
  $region34: #{base_cnn_network_mask_forward.1} parent=0
    _
  %s9 = ssub.s32 1, %s7
  %s10 = scalar_select 0, %s9, %s7
  // Predicated region
  $region2: #{base_cnn_network_mask_forward.1} parent=0 // pred_check
    _
  $region3: #{base_cnn_network_mask_forward.1} parent=0 // pred_check_branch
    %12 = sbr.rel (0) target = $region5
  $region4: #{base_cnn_network_mask_forward.1} parent=0 // pred_region
    _
  $region5: #{base_cnn_network_mask_forward.1} parent=0 // pred_fallthru
    _
  // Predicated region
  $region6: #{base_cnn_network_mask_forward.1} parent=0 // pred_check
    _
  $region7: #{base_cnn_network_mask_forward.1} parent=0 // pred_check_branch
    %14 = sbr.rel (0) target = $region9
  $region8: #{base_cnn_network_mask_forward.1} parent=0 // pred_region
    _
  $region9: #{base_cnn_network_mask_forward.1} parent=0 // pred_fallthru
    _
  // Predicated region
  $region10: #{base_cnn_network_mask_forward.1} parent=0 // pred_check
    _
  $region11: #{base_cnn_network_mask_forward.1} parent=0 // pred_check_branch
    %16 = sbr.rel (0) target = $region13
  $region12: #{base_cnn_network_mask_forward.1} parent=0 // pred_region
    _
  $region13: #{base_cnn_network_mask_forward.1} parent=0 // pred_fallthru
    _
  // Predicated region
  $region14: #{base_cnn_network_mask_forward.1} parent=0 // pred_check
    _
  $region15: #{base_cnn_network_mask_forward.1} parent=0 // pred_check_branch
    %18 = sbr.rel (0) target = $region17
  $region16: #{base_cnn_network_mask_forward.1} parent=0 // pred_region
    _
  $region17: #{base_cnn_network_mask_forward.1} parent=0 // pred_fallthru
    _
  // Predicated region
  $region18: #{base_cnn_network_mask_forward.1} parent=0 // pred_check
    _
  $region19: #{base_cnn_network_mask_forward.1} parent=0 // pred_check_branch
    %20 = sbr.rel (0) target = $region21
  $region20: #{base_cnn_network_mask_forward.1} parent=0 // pred_region
    _
  $region21: #{base_cnn_network_mask_forward.1} parent=0 // pred_fallthru
    _
  // Predicated region
  $region22: #{base_cnn_network_mask_forward.1} parent=0 // pred_check
    _
  $region23: #{base_cnn_network_mask_forward.1} parent=0 // pred_check_branch
    %22 = sbr.rel (0) target = $region25
  $region24: #{base_cnn_network_mask_forward.1} parent=0 // pred_region
    _
  $region25: #{base_cnn_network_mask_forward.1} parent=0 // pred_fallthru
    _
  %v23 = vld [vmem:[%s0] sm:$0x3]
  %v24 = vld [vmem:[%s1] sm:$0x3]
  %v25 = vld [vmem:[%s2] sm:$0xff]
  %v26 = vld [vmem:[%s2 + $0x8] sm:$0xff]
  %v27 = vld [vmem:[%s2 + $0x10] sm:$0xff]
  %v28 = vld [vmem:[%s2 + $0x18] sm:$0xff]
  %v29 = vld [vmem:[%s2 + $0x20] sm:$0xff]
  %v30 = vld [vmem:[%s2 + $0x28] sm:$0xff]
  %v31 = vld [vmem:[%s2 + $0x30] sm:$0xff]
  %v32 = vld [vmem:[%s2 + $0x38] sm:$0xff]
  %v33 = vld [vmem:[%s2 + $0x40] sm:$0x3]
  %v34 = vld [vmem:[%s3] sm:$0xff]
  %v35 = vld [vmem:[%s3 + $0x8] sm:$0xf]
  %vm36 = vcmask 97280
  %v38 = vsel %vm36, %v24, 0
  %vm40 = vcmask 1043456
  %v42 = vsel %vm40, %v35, 0
  %44 = vmatprep.subr.mxu0 0.0
  %45 = vmatpush1.msra.mxu0 %v34
  %46 = vmatprep.subr.mxu0 0.0
  %47 = vmatpush1.msra.mxu0 %v42
  %48 = vmatprep.subr.mxu0 0.0
  %49 = vmatpush1.msra.mxu0 0.0
  %50 = vmatprep.subr.mxu0 0.0
  %51 = vmatpush1.msra.mxu0 0.0
  %52 = vmatprep.subr.mxu0 0.0
  %53 = vmatpush1.msra.mxu0 0.0
  %54 = vmatprep.subr.mxu0 0.0
  %55 = vmatpush1.msra.mxu0 0.0
  %56 = vmatprep.subr.mxu0 0.0
  %57 = vmatpush1.msra.mxu0 0.0
  %58 = vmatprep.subr.mxu0 0.0
  %59 = vmatpush1.msra.mxu0 0.0
  %60 = vmatprep.subr.mxu0 0.0
  %61 = vmatpush1.msra.mxu0 0.0
  %62 = vmatprep.subr.mxu0 0.0
  %63 = vmatpush1.msra.mxu0 0.0
  %64 = vmatprep.subr.mxu0 0.0
  %65 = vmatpush1.msra.mxu0 0.0
  %66 = vmatprep.subr.mxu0 0.0
  %67 = vmatpush1.msra.mxu0 0.0
  %68 = vmatprep.subr.mxu0 0.0
  %69 = vmatpush1.msra.mxu0 0.0
  %70 = vmatprep.subr.mxu0 0.0
  %71 = vmatpush1.msra.mxu0 0.0
  %72 = vmatprep.subr.mxu0 0.0
  %73 = vmatpush1.msra.mxu0 0.0
  %74 = vmatprep.subr.mxu0 0.0
  %75 = vmatpush1.msra.mxu0 0.0
  %76 = vmatprep.subr.mxu0 0.0
  %77 = vmatpush1.msra.mxu0 0.0
  %78 = vmatprep.subr.mxu0 0.0
  %79 = vmatpush1.msra.mxu0 0.0
  %80 = vmatprep.subr.mxu0 0.0
  %81 = vmatpush1.msra.mxu0 0.0
  %82 = vmatprep.subr.mxu0 0.0
  %83 = vmatpush1.msra.mxu0 0.0
  %84 = vmatprep.subr.mxu0 0.0
  %85 = vmatpush1.msra.mxu0 0.0
  %86 = vmatprep.subr.mxu0 0.0
  %87 = vmatpush1.msra.mxu0 0.0
  %88 = vmatprep.subr.mxu0 0.0
  %89 = vmatpush1.msra.mxu0 0.0
  %90 = vmatprep.subr.mxu0 0.0
  %91 = vmatpush1.msra.mxu0 0.0
  %92 = vmatprep.subr.mxu0 0.0
  %93 = vmatpush1.msra.mxu0 0.0
  %94 = vmatprep.subr.mxu0 0.0
  %95 = vmatpush1.msra.mxu0 0.0
  %96 = vmatprep.subr.mxu0 0.0
  %97 = vmatpush1.msra.mxu0 0.0
  %98 = vmatprep.subr.mxu0 0.0
  %99 = vmatpush1.msra.mxu0 0.0
  %100 = vmatprep.subr.mxu0 0.0
  %101 = vmatpush1.msra.mxu0 0.0
  %102 = vmatprep.subr.mxu0 0.0
  %103 = vmatpush1.msra.mxu0 0.0
  %104 = vmatprep.subr.mxu0 0.0
  %105 = vmatpush1.msra.mxu0 0.0
  %106 = vmatprep.subr.mxu0 0.0
  %107 = vmatpush1.msra.mxu0 0.0
  %108 = vmatprep.mubr.f32.mxu0 0.0
  %109 = vmatmul.mubr.f32.gmra.mrb[0].mxu0 %v38
  %v110 = vpop.f32.mrb[0].mxu0
  %v111 = vadd.f32 0.0, %v110
  %v112 = vpop.f32.mrb[0].mxu0
  %113 = vdwg.mxu0
  %vm114 = vcmask 539648
  %v116 = vsel %vm114, %v23, 0
  %vm118 = vcmask 1041408
  %v120 = vsel %vm118, %v33, 0
  %122 = vmatprep.subr.mxu0 0.0
  %123 = vmatpush1.msra.mxu0 %v25
  %124 = vmatprep.subr.mxu0 0.0
  %125 = vmatpush1.msra.mxu0 %v26
  %126 = vmatprep.subr.mxu0 0.0
  %127 = vmatpush1.msra.mxu0 %v27
  %128 = vmatprep.subr.mxu0 0.0
  %129 = vmatpush1.msra.mxu0 %v28
  %130 = vmatprep.subr.mxu0 0.0
  %131 = vmatpush1.msra.mxu0 %v29
  %132 = vmatprep.subr.mxu0 0.0
  %133 = vmatpush1.msra.mxu0 %v30
  %134 = vmatprep.subr.mxu0 0.0
  %135 = vmatpush1.msra.mxu0 %v31
  %136 = vmatprep.subr.mxu0 0.0
  %137 = vmatpush1.msra.mxu0 %v32
  %138 = vmatprep.subr.mxu0 0.0
  %139 = vmatpush1.msra.mxu0 %v120
  %140 = vmatprep.subr.mxu0 0.0
  %141 = vmatpush1.msra.mxu0 0.0
  %142 = vmatprep.subr.mxu0 0.0
  %143 = vmatpush1.msra.mxu0 0.0
  %144 = vmatprep.subr.mxu0 0.0
  %145 = vmatpush1.msra.mxu0 0.0
  %146 = vmatprep.subr.mxu0 0.0
  %147 = vmatpush1.msra.mxu0 0.0
  %148 = vmatprep.subr.mxu0 0.0
  %149 = vmatpush1.msra.mxu0 0.0
  %150 = vmatprep.subr.mxu0 0.0
  %151 = vmatpush1.msra.mxu0 0.0
  %152 = vmatprep.subr.mxu0 0.0
  %153 = vmatpush1.msra.mxu0 0.0
  %154 = vmatprep.subr.mxu0 0.0
  %155 = vmatpush1.msra.mxu0 0.0
  %156 = vmatprep.subr.mxu0 0.0
  %157 = vmatpush1.msra.mxu0 0.0
  %158 = vmatprep.subr.mxu0 0.0
  %159 = vmatpush1.msra.mxu0 0.0
  %160 = vmatprep.subr.mxu0 0.0
  %161 = vmatpush1.msra.mxu0 0.0
  %162 = vmatprep.subr.mxu0 0.0
  %163 = vmatpush1.msra.mxu0 0.0
  %164 = vmatprep.subr.mxu0 0.0
  %165 = vmatpush1.msra.mxu0 0.0
  %166 = vmatprep.subr.mxu0 0.0
  %167 = vmatpush1.msra.mxu0 0.0
  %168 = vmatprep.subr.mxu0 0.0
  %169 = vmatpush1.msra.mxu0 0.0
  %170 = vmatprep.subr.mxu0 0.0
  %171 = vmatpush1.msra.mxu0 0.0
  %172 = vmatprep.subr.mxu0 0.0
  %173 = vmatpush1.msra.mxu0 0.0
  %174 = vmatprep.subr.mxu0 0.0
  %175 = vmatpush1.msra.mxu0 0.0
  %176 = vmatprep.subr.mxu0 0.0
  %177 = vmatpush1.msra.mxu0 0.0
  %178 = vmatprep.subr.mxu0 0.0
  %179 = vmatpush1.msra.mxu0 0.0
  %180 = vmatprep.subr.mxu0 0.0
  %181 = vmatpush1.msra.mxu0 0.0
  %182 = vmatprep.subr.mxu0 0.0
  %183 = vmatpush1.msra.mxu0 0.0
  %184 = vmatprep.subr.mxu0 0.0
  %185 = vmatpush1.msra.mxu0 0.0
  %186 = vmatprep.mubr.f32.mxu0 0.0
  %187 = vmatmul.mubr.f32.gmra.mrb[0].mxu0 %v116
  %v188 = vpop.f32.mrb[0].mxu0
  %v189 = vadd.f32 %v111, %v188
  %v190 = vpop.f32.mrb[0].mxu0
  %191 = vdwg.mxu0
  %v192 = vld [vmem:[%s5] sm:$0x1]
  %v194 = vlaneseq
  %v195 = vshrl.u32 %v194, 7
  %v196 = vsub.s32 0, %v195
  %v197 = vrot.slane %v192, %v196
  %v199 = vadd.f32 %v189, %v197
  %v200 = vld [vmem:[%s4] sm:$0xff]
  %v201 = vld [vmem:[%s4 + $0x8] sm:$0xf]
  %v203 = vsel %vm40, %v201, 0
  %205 = vmatprep.subr.mxu0 0.0
  %206 = vmatpush1.msra.mxu0 %v200
  %207 = vmatprep.subr.mxu0 0.0
  %208 = vmatpush1.msra.mxu0 %v203
  %209 = vmatprep.subr.mxu0 0.0
  %210 = vmatpush1.msra.mxu0 0.0
  %211 = vmatprep.subr.mxu0 0.0
  %212 = vmatpush1.msra.mxu0 0.0
  %213 = vmatprep.subr.mxu0 0.0
  %214 = vmatpush1.msra.mxu0 0.0
  %215 = vmatprep.subr.mxu0 0.0
  %216 = vmatpush1.msra.mxu0 0.0
  %217 = vmatprep.subr.mxu0 0.0
  %218 = vmatpush1.msra.mxu0 0.0
  %219 = vmatprep.subr.mxu0 0.0
  %220 = vmatpush1.msra.mxu0 0.0
  %221 = vmatprep.subr.mxu0 0.0
  %222 = vmatpush1.msra.mxu0 0.0
  %223 = vmatprep.subr.mxu0 0.0
  %224 = vmatpush1.msra.mxu0 0.0
  %225 = vmatprep.subr.mxu0 0.0
  %226 = vmatpush1.msra.mxu0 0.0
  %227 = vmatprep.subr.mxu0 0.0
  %228 = vmatpush1.msra.mxu0 0.0
  %229 = vmatprep.subr.mxu0 0.0
  %230 = vmatpush1.msra.mxu0 0.0
  %231 = vmatprep.subr.mxu0 0.0
  %232 = vmatpush1.msra.mxu0 0.0
  %233 = vmatprep.subr.mxu0 0.0
  %234 = vmatpush1.msra.mxu0 0.0
  %235 = vmatprep.subr.mxu0 0.0
  %236 = vmatpush1.msra.mxu0 0.0
  %237 = vmatprep.subr.mxu0 0.0
  %238 = vmatpush1.msra.mxu0 0.0
  %239 = vmatprep.subr.mxu0 0.0
  %240 = vmatpush1.msra.mxu0 0.0
  %241 = vmatprep.subr.mxu0 0.0
  %242 = vmatpush1.msra.mxu0 0.0
  %243 = vmatprep.subr.mxu0 0.0
  %244 = vmatpush1.msra.mxu0 0.0
  %245 = vmatprep.subr.mxu0 0.0
  %246 = vmatpush1.msra.mxu0 0.0
  %247 = vmatprep.subr.mxu0 0.0
  %248 = vmatpush1.msra.mxu0 0.0
  %249 = vmatprep.subr.mxu0 0.0
  %250 = vmatpush1.msra.mxu0 0.0
  %251 = vmatprep.subr.mxu0 0.0
  %252 = vmatpush1.msra.mxu0 0.0
  %253 = vmatprep.subr.mxu0 0.0
  %254 = vmatpush1.msra.mxu0 0.0
  %255 = vmatprep.subr.mxu0 0.0
  %256 = vmatpush1.msra.mxu0 0.0
  %257 = vmatprep.subr.mxu0 0.0
  %258 = vmatpush1.msra.mxu0 0.0
  %259 = vmatprep.subr.mxu0 0.0
  %260 = vmatpush1.msra.mxu0 0.0
  %261 = vmatprep.subr.mxu0 0.0
  %262 = vmatpush1.msra.mxu0 0.0
  %263 = vmatprep.subr.mxu0 0.0
  %264 = vmatpush1.msra.mxu0 0.0
  %265 = vmatprep.subr.mxu0 0.0
  %266 = vmatpush1.msra.mxu0 0.0
  %267 = vmatprep.subr.mxu0 0.0
  %268 = vmatpush1.msra.mxu0 0.0
  %269 = vmatprep.mubr.f32.mxu0 0.0
  %270 = vmatmul.mubr.f32.gmra.mrb[0].mxu0 %v38
  %v271 = vpop.f32.mrb[0].mxu0
  %v272 = vadd.f32 0.0, %v271
  %v273 = vpop.f32.mrb[0].mxu0
  %274 = vdwg.mxu0
  %v275 = vsub.f32 %v272, 1e+30
  %v276 = vadd.f32 %v199, %v275
  %vm277 = vcmask 41984
  %v278 = vsel %vm277, %v276, -inf
  %279 = vmax.xlane.f32.xlu0 %v278
  %v280 = vpop.xlane.xlu0 %279
  %v281 = vsub.f32 %v276, %v280
  %v282 = vmul.f32 %v281, 1.442695
  %v283 = vpow.pop %v282
  %v284 = vmul.f32 %v283, %v24
  %vm285 = vcmask 48128
  %v287 = vsel %vm285, %v284, 0
  %vm289 = vcmask 1045504
  %v291 = vsel %vm289, 1.0, 0
  %293 = vmatprep.subr.mxu0 0.0
  %294 = vmatpush1.msra.mxu0 %v291
  %295 = vmatprep.subr.mxu0 0.0
  %296 = vmatpush1.msra.mxu0 0.0
  %297 = vmatprep.subr.mxu0 0.0
  %298 = vmatpush1.msra.mxu0 0.0
  %299 = vmatprep.subr.mxu0 0.0
  %300 = vmatpush1.msra.mxu0 0.0
  %301 = vmatprep.subr.mxu0 0.0
  %302 = vmatpush1.msra.mxu0 0.0
  %303 = vmatprep.subr.mxu0 0.0
  %304 = vmatpush1.msra.mxu0 0.0
  %305 = vmatprep.subr.mxu0 0.0
  %306 = vmatpush1.msra.mxu0 0.0
  %307 = vmatprep.subr.mxu0 0.0
  %308 = vmatpush1.msra.mxu0 0.0
  %309 = vmatprep.subr.mxu0 0.0
  %310 = vmatpush1.msra.mxu0 0.0
  %311 = vmatprep.subr.mxu0 0.0
  %312 = vmatpush1.msra.mxu0 0.0
  %313 = vmatprep.subr.mxu0 0.0
  %314 = vmatpush1.msra.mxu0 0.0
  %315 = vmatprep.subr.mxu0 0.0
  %316 = vmatpush1.msra.mxu0 0.0
  %317 = vmatprep.subr.mxu0 0.0
  %318 = vmatpush1.msra.mxu0 0.0
  %319 = vmatprep.subr.mxu0 0.0
  %320 = vmatpush1.msra.mxu0 0.0
  %321 = vmatprep.subr.mxu0 0.0
  %322 = vmatpush1.msra.mxu0 0.0
  %323 = vmatprep.subr.mxu0 0.0
  %324 = vmatpush1.msra.mxu0 0.0
  %325 = vmatprep.subr.mxu0 0.0
  %326 = vmatpush1.msra.mxu0 0.0
  %327 = vmatprep.subr.mxu0 0.0
  %328 = vmatpush1.msra.mxu0 0.0
  %329 = vmatprep.subr.mxu0 0.0
  %330 = vmatpush1.msra.mxu0 0.0
  %331 = vmatprep.subr.mxu0 0.0
  %332 = vmatpush1.msra.mxu0 0.0
  %333 = vmatprep.subr.mxu0 0.0
  %334 = vmatpush1.msra.mxu0 0.0
  %335 = vmatprep.subr.mxu0 0.0
  %336 = vmatpush1.msra.mxu0 0.0
  %337 = vmatprep.subr.mxu0 0.0
  %338 = vmatpush1.msra.mxu0 0.0
  %339 = vmatprep.subr.mxu0 0.0
  %340 = vmatpush1.msra.mxu0 0.0
  %341 = vmatprep.subr.mxu0 0.0
  %342 = vmatpush1.msra.mxu0 0.0
  %343 = vmatprep.subr.mxu0 0.0
  %344 = vmatpush1.msra.mxu0 0.0
  %345 = vmatprep.subr.mxu0 0.0
  %346 = vmatpush1.msra.mxu0 0.0
  %347 = vmatprep.subr.mxu0 0.0
  %348 = vmatpush1.msra.mxu0 0.0
  %349 = vmatprep.subr.mxu0 0.0
  %350 = vmatpush1.msra.mxu0 0.0
  %351 = vmatprep.subr.mxu0 0.0
  %352 = vmatpush1.msra.mxu0 0.0
  %353 = vmatprep.subr.mxu0 0.0
  %354 = vmatpush1.msra.mxu0 0.0
  %355 = vmatprep.subr.mxu0 0.0
  %356 = vmatpush1.msra.mxu0 0.0
  %357 = vmatprep.mubr.f32.mxu0 0.0
  %358 = vmatmul.mubr.f32.gmra.mrb[0].mxu0 %v287
  %v359 = vpop.f32.mrb[0].mxu0
  %v360 = vadd.f32 0.0, %v359
  %v361 = vpop.f32.mrb[0].mxu0
  %362 = vdwg.mxu0
  %v364 = vsel %vm285, %v283, 0
  %366 = vmatprep.subr.mxu0 0.0
  %367 = vmatpush1.msra.mxu0 %v291
  %368 = vmatprep.subr.mxu0 0.0
  %369 = vmatpush1.msra.mxu0 0.0
  %370 = vmatprep.subr.mxu0 0.0
  %371 = vmatpush1.msra.mxu0 0.0
  %372 = vmatprep.subr.mxu0 0.0
  %373 = vmatpush1.msra.mxu0 0.0
  %374 = vmatprep.subr.mxu0 0.0
  %375 = vmatpush1.msra.mxu0 0.0
  %376 = vmatprep.subr.mxu0 0.0
  %377 = vmatpush1.msra.mxu0 0.0
  %378 = vmatprep.subr.mxu0 0.0
  %379 = vmatpush1.msra.mxu0 0.0
  %380 = vmatprep.subr.mxu0 0.0
  %381 = vmatpush1.msra.mxu0 0.0
  %382 = vmatprep.subr.mxu0 0.0
  %383 = vmatpush1.msra.mxu0 0.0
  %384 = vmatprep.subr.mxu0 0.0
  %385 = vmatpush1.msra.mxu0 0.0
  %386 = vmatprep.subr.mxu0 0.0
  %387 = vmatpush1.msra.mxu0 0.0
  %388 = vmatprep.subr.mxu0 0.0
  %389 = vmatpush1.msra.mxu0 0.0
  %390 = vmatprep.subr.mxu0 0.0
  %391 = vmatpush1.msra.mxu0 0.0
  %392 = vmatprep.subr.mxu0 0.0
  %393 = vmatpush1.msra.mxu0 0.0
  %394 = vmatprep.subr.mxu0 0.0
  %395 = vmatpush1.msra.mxu0 0.0
  %396 = vmatprep.subr.mxu0 0.0
  %397 = vmatpush1.msra.mxu0 0.0
  %398 = vmatprep.subr.mxu0 0.0
  %399 = vmatpush1.msra.mxu0 0.0
  %400 = vmatprep.subr.mxu0 0.0
  %401 = vmatpush1.msra.mxu0 0.0
  %402 = vmatprep.subr.mxu0 0.0
  %403 = vmatpush1.msra.mxu0 0.0
  %404 = vmatprep.subr.mxu0 0.0
  %405 = vmatpush1.msra.mxu0 0.0
  %406 = vmatprep.subr.mxu0 0.0
  %407 = vmatpush1.msra.mxu0 0.0
  %408 = vmatprep.subr.mxu0 0.0
  %409 = vmatpush1.msra.mxu0 0.0
  %410 = vmatprep.subr.mxu0 0.0
  %411 = vmatpush1.msra.mxu0 0.0
  %412 = vmatprep.subr.mxu0 0.0
  %413 = vmatpush1.msra.mxu0 0.0
  %414 = vmatprep.subr.mxu0 0.0
  %415 = vmatpush1.msra.mxu0 0.0
  %416 = vmatprep.subr.mxu0 0.0
  %417 = vmatpush1.msra.mxu0 0.0
  %418 = vmatprep.subr.mxu0 0.0
  %419 = vmatpush1.msra.mxu0 0.0
  %420 = vmatprep.subr.mxu0 0.0
  %421 = vmatpush1.msra.mxu0 0.0
  %422 = vmatprep.subr.mxu0 0.0
  %423 = vmatpush1.msra.mxu0 0.0
  %424 = vmatprep.subr.mxu0 0.0
  %425 = vmatpush1.msra.mxu0 0.0
  %426 = vmatprep.subr.mxu0 0.0
  %427 = vmatpush1.msra.mxu0 0.0
  %428 = vmatprep.subr.mxu0 0.0
  %429 = vmatpush1.msra.mxu0 0.0
  %430 = vmatprep.mubr.f32.mxu0 0.0
  %431 = vmatmul.mubr.f32.gmra.mrb[0].mxu0 %v364
  %v432 = vpop.f32.mrb[0].mxu0
  %v433 = vadd.f32 0.0, %v432
  %v434 = vpop.f32.mrb[0].mxu0
  %435 = vdwg.mxu0
  %v436 = vrcp.pop %v433
  %v437 = vmul.f32 %v433, %v436
  %v438 = vsub.f32 2.0, %v437
  %v439 = vmul.f32 %v436, %v438
  %v440 = vmul.f32 %v360, %v439
  %vm441 = vcmask 1024
  %442 = vst.msk [vmem:[%s6] sm:$0x3] %vm441, %v440
  // Predicated region
  $region26: #{base_cnn_network_mask_forward.1} parent=0 // pred_check
    _
  $region27: #{base_cnn_network_mask_forward.1} parent=0 // pred_check_branch
    %444 = sbr.rel (0) target = $region29
  $region28: #{base_cnn_network_mask_forward.1} parent=0 // pred_region
    _
  $region29: #{base_cnn_network_mask_forward.1} parent=0 // pred_fallthru
    _
  // Predicated region
  $region30: #{base_cnn_network_mask_forward.1} parent=0 // pred_check
    _
  $region31: #{base_cnn_network_mask_forward.1} parent=0 // pred_check_branch
    %446 = sbr.rel (0) target = $region33
  $region32: #{base_cnn_network_mask_forward.1} parent=0 // pred_region
    _
  $region33: #{base_cnn_network_mask_forward.1} parent=0 // pred_fallthru
    _

</llo_original>
